<compile_context>
chip_gen: v5e
topology: v5e:2x2
jax: 0.10.0
libtpu: 0.0.40
codegen_flags: <defaults>
</compile_context>

<pallas_src>
import jax
import jax.numpy as jnp
from jax.experimental import pallas as pl
from jax.experimental.pallas import tpu as pltpu


def _identity_kernel(x_ref, o_ref):
    # Full-tile load + store (the only "compute" the module performs).
    o_ref[...] = x_ref[...]


def _round_down(n, m):
    return max((n // m) * m, m)


def _pallas_identity_2d(x2: jax.Array) -> jax.Array:
    """Tiled identity copy on a 2-D (rows, lanes) slab, aliased in-place."""
    R, W = x2.shape
    itemsize = jnp.dtype(x2.dtype).itemsize

    # Lane (last) dim: block must be a multiple of 128 OR the full dim.
    # Keep it lane-dense (large) for unmasked vst; ragged edges are handled
    # by Pallas, so no padding is needed.
    if W <= 2048:
        tw = W                      # full dim -> always legal
    else:
        tw = 2048                   # multiple of 128

    # Row dim: target ~4 MiB tiles so in+out double-buffering stays around
    # 16 MiB -- safe on v7x (64 MiB VMEM) and under v5e's scoped default.
    target_tile_bytes = 4 * 1024 * 1024
    max_rows = max(target_tile_bytes // (tw * itemsize), 1)
    if R <= max_rows:
        tr = R                      # full dim -> always legal
    else:
        tr = _round_down(min(max_rows, R), 64)  # multiple of 8 (packed-safe)

    grid = (pl.cdiv(R, tr), pl.cdiv(W, tw))

    return pl.pallas_call(
        _identity_kernel,
        out_shape=jax.ShapeDtypeStruct((R, W), x2.dtype),
        grid=grid,
        in_specs=[pl.BlockSpec((tr, tw), lambda i, j: (i, j))],
        out_specs=pl.BlockSpec((tr, tw), lambda i, j: (i, j)),
        input_output_aliases={0: 0},   # output aliases input buffer
        compiler_params=pltpu.CompilerParams(
            dimension_semantics=("parallel", "parallel"),
            vmem_limit_bytes=32 * 1024 * 1024,
        ),
    )(x2)


def no_mask_forward(x: jax.Array, noisy: jax.Array, *,
                    force_pallas: bool = False) -> jax.Array:
    """Pallas implementation of NoMask.forward(x, noisy) -> x."""
    del noisy  # unused by the module, exactly like the PyTorch forward

    # Highest-value optimization (per review): the module is identity, so the
    # best kernel is no kernel at all -- no HBM round-trip, no launch cost.
    if not force_pallas:
        return x

    # Optional on-device identity copy for callers needing a pallas_call.
    if x.ndim == 0 or x.size == 0:
        return x

    orig_shape = x.shape
    lanes = orig_shape[-1]
    rows = x.size // lanes
    x2 = x.reshape(rows, lanes)        # layout-preserving flatten (no copy)
    out = _pallas_identity_2d(x2)
    return out.reshape(orig_shape)     # no slice, no astype (dtype unchanged)


if __name__ == "__main__":
    key = jax.random.PRNGKey(0)
    kx, kn = jax.random.split(key)

    # Small NCHW-shaped inputs consistent with a conv-style model.
    x = jax.random.normal(kx, (2, 4, 16, 16), dtype=jnp.float32)
    noisy = jax.random.normal(kn, (2, 4, 16, 16), dtype=jnp.float32)

    # Default path: true no-op (the module's real semantics).
    y_fast = no_mask_forward(x, noisy)

    # Pallas path: run the kernel once to verify it compiles & runs on TPU.
    y_pallas = no_mask_forward(x, noisy, force_pallas=True)
    y_pallas = jax.block_until_ready(y_pallas)

    assert y_fast.shape == x.shape and y_fast.dtype == x.dtype
    assert y_pallas.shape == x.shape and y_pallas.dtype == x.dtype
    assert jnp.array_equal(y_fast, x)
    assert jnp.array_equal(y_pallas, x)
    print("KERNEL_OK")
</pallas_src>

<mosaic_0001>
module attributes {stable_mosaic.version = 11 : i64} {
  func.func @_identity_kernel(%arg0: i32, %arg1: i32, %arg2: memref<128x16xf32, #tpu.memory_space<vmem>>, %arg3: memref<128x16xf32, #tpu.memory_space<vmem>>) attributes {dimension_semantics = [#tpu.dimension_semantics<parallel>, #tpu.dimension_semantics<parallel>], iteration_bounds = array<i64: 1, 1>, scalar_prefetch = 0 : i64, scratch_operands = 0 : i64, tpu.core_type = #tpu.core_type<tc>, window_params = [{transform_indices = @transform_0, window_bounds = array<i64: 128, 16>}, {transform_indices = @transform_1, window_bounds = array<i64: 128, 16>}]} {
    %c0 = arith.constant 0 : index
    %c0_0 = arith.constant 0 : index
    %0 = vector.load %arg2[%c0, %c0_0] : memref<128x16xf32, #tpu.memory_space<vmem>>, vector<128x16xf32>
    %c0_1 = arith.constant 0 : index
    %c0_2 = arith.constant 0 : index
    %1 = vector.load %arg3[%c0_1, %c0_2] : memref<128x16xf32, #tpu.memory_space<vmem>>, vector<128x16xf32>
    tpu.vector_store %arg3[%c0_1, %c0_2], %0 {strides = array<i32>} : memref<128x16xf32, #tpu.memory_space<vmem>>, vector<128x16xf32>,
    return
  }
  func.func @transform_0(%arg0: i32, %arg1: i32) -> (i32, i32) {
    %c0_i32 = arith.constant 0 : i32
    return %arg0, %arg1 : i32, i32
  }
  func.func @transform_1(%arg0: i32, %arg1: i32) -> (i32, i32) {
    %c0_i32 = arith.constant 0 : i32
    return %arg0, %arg1 : i32, i32
  }
}

</mosaic_0001>

<llo_original>
// kernel: tpu_custom_call.1
$region0: #{tpu_custom_call.1}
  #allocation0 [shape = 'u32[]', space=smem, size = 0x4, offset = 0x4, fixed_abs, tag = 'smem constant byte address 0x4 - core index']
  #allocation1 [shape = 'u32[72,128]{1,0:T(1,128)}', space=vmem, size = 0x9000, scoped, tag = 'internal scratch']
  %s0 = inlined_call_operand.vmem [shape: f32[128,16], index: 0, kind: input, shape index: {}, may-alias: {0,1}]
  %s1 = inlined_call_operand.vmem [shape: f32[128,16], index: 1, kind: output, shape index: {}, may-alias: {0,1}]
  %s2 = sld [smem:[#allocation0]]
  $region14: #{tpu_custom_call.1} parent=0
    _
  %s4 = ssub.s32 1, %s2
  %s5 = scalar_select 0, %s4, %s2
  // Predicated region
  $region2: #{tpu_custom_call.1} parent=0 // pred_check
    _
  $region3: #{tpu_custom_call.1} parent=0 // pred_check_branch
    %7 = sbr.rel (0) target = $region5
  $region4: #{tpu_custom_call.1} parent=0 // pred_region
    _
  $region5: #{tpu_custom_call.1} parent=0 // pred_fallthru
    _
  %v8 = vld [vmem:[%s0] sm:$0xff]
  %v9 = vld [vmem:[%s0 + $0x8] sm:$0xff]
  %v10 = vld [vmem:[%s0 + $0x10] sm:$0xff]
  %v11 = vld [vmem:[%s0 + $0x18] sm:$0xff]
  %v12 = vld [vmem:[%s0 + $0x20] sm:$0xff]
  %v13 = vld [vmem:[%s0 + $0x28] sm:$0xff]
  %v14 = vld [vmem:[%s0 + $0x30] sm:$0xff]
  %v15 = vld [vmem:[%s0 + $0x38] sm:$0xff]
  %v16 = vld [vmem:[%s0 + $0x40] sm:$0xff]
  %v17 = vld [vmem:[%s0 + $0x48] sm:$0xff]
  %v18 = vld [vmem:[%s0 + $0x50] sm:$0xff]
  %v19 = vld [vmem:[%s0 + $0x58] sm:$0xff]
  %v20 = vld [vmem:[%s0 + $0x60] sm:$0xff]
  %v21 = vld [vmem:[%s0 + $0x68] sm:$0xff]
  %v22 = vld [vmem:[%s0 + $0x70] sm:$0xff]
  %v23 = vld [vmem:[%s0 + $0x78] sm:$0xff]
  %vm24 = vcmask 130048
  %25 = vst.msk [vmem:[%s1] sm:$0xff] %vm24, %v8
  %26 = vst.msk [vmem:[%s1 + $0x8] sm:$0xff] %vm24, %v9
  %27 = vst.msk [vmem:[%s1 + $0x10] sm:$0xff] %vm24, %v10
  %28 = vst.msk [vmem:[%s1 + $0x18] sm:$0xff] %vm24, %v11
  %29 = vst.msk [vmem:[%s1 + $0x20] sm:$0xff] %vm24, %v12
  %30 = vst.msk [vmem:[%s1 + $0x28] sm:$0xff] %vm24, %v13
  %31 = vst.msk [vmem:[%s1 + $0x30] sm:$0xff] %vm24, %v14
  %32 = vst.msk [vmem:[%s1 + $0x38] sm:$0xff] %vm24, %v15
  %33 = vst.msk [vmem:[%s1 + $0x40] sm:$0xff] %vm24, %v16
  %34 = vst.msk [vmem:[%s1 + $0x48] sm:$0xff] %vm24, %v17
  %35 = vst.msk [vmem:[%s1 + $0x50] sm:$0xff] %vm24, %v18
  %36 = vst.msk [vmem:[%s1 + $0x58] sm:$0xff] %vm24, %v19
  %37 = vst.msk [vmem:[%s1 + $0x60] sm:$0xff] %vm24, %v20
  %38 = vst.msk [vmem:[%s1 + $0x68] sm:$0xff] %vm24, %v21
  %39 = vst.msk [vmem:[%s1 + $0x70] sm:$0xff] %vm24, %v22
  %40 = vst.msk [vmem:[%s1 + $0x78] sm:$0xff] %vm24, %v23
  // Predicated region
  $region6: #{tpu_custom_call.1} parent=0 // pred_check
    _
  $region7: #{tpu_custom_call.1} parent=0 // pred_check_branch
    %42 = sbr.rel (0) target = $region9
  $region8: #{tpu_custom_call.1} parent=0 // pred_region
    _
  $region9: #{tpu_custom_call.1} parent=0 // pred_fallthru
    _
  // Predicated region
  $region10: #{tpu_custom_call.1} parent=0 // pred_check
    _
  $region11: #{tpu_custom_call.1} parent=0 // pred_check_branch
    %44 = sbr.rel (0) target = $region13
  $region12: #{tpu_custom_call.1} parent=0 // pred_region
    _
  $region13: #{tpu_custom_call.1} parent=0 // pred_fallthru
    _

</llo_original>
